<compile_context>
chip_gen: v5e
topology: v5e:2x2
jax: 0.10.0
libtpu: 0.0.40
codegen_flags: <defaults>
</compile_context>

<pallas_src>
import jax
import jax.numpy as jnp
from jax import lax
from jax.experimental import pallas as pl
from jax.experimental.pallas import tpu as pltpu


def _gcn_kernel(a_ref, x_ref, w_ref, o_ref):
    bt, n, c_in = x_ref.shape
    c_out = w_ref.shape[1]

    a = a_ref[...]                                   # (Bt, N, N)  f32
    x = x_ref[...]                                   # (Bt, N, C_in)
    w = w_ref[...]                                   # (C_in, C_out)

    # degree = row-sum of A;  sqrt(pinv(diag(deg))) -> 1/sqrt(d) where d != 0 else 0
    deg = jnp.sum(a, axis=2, keepdims=True)                       # (Bt, N, 1)
    d_inv_sqrt = jnp.where(deg != 0, lax.rsqrt(deg), 0.0)         # (Bt, N, 1)

    # Hoisted weight matmul: Y = (d * X) @ W as one big (Bt*N, C_in) matmul.
    x_scaled = (d_inv_sqrt * x).reshape(bt * n, c_in)
    y = jnp.dot(x_scaled, w, preferred_element_type=jnp.float32)
    y = y.reshape(bt, n, c_out)                                   # (Bt, N, C_out)

    # (A + I) @ Y == A @ Y + Y  (no explicit identity materialized).
    ay = jnp.einsum("bij,bjc->bic", a, y,
                    preferred_element_type=jnp.float32)           # (Bt, N, C_out)
    out = jnp.maximum(d_inv_sqrt * (ay + y), 0.0)

    o_ref[...] = out.astype(o_ref.dtype)


def _pick_block_batch(batch, max_bt=64):
    """Largest divisor of `batch` that keeps >= 2 grid steps (megacore) and <= max_bt."""
    if batch <= 1:
        return max(batch, 1)
    target = min(max_bt, batch // 2)
    for bt in range(target, 0, -1):
        if batch % bt == 0:
            return bt
    return 1


def gcn_conv(x, w, graph_size, *, block_batch=None):
    B, N, d_in_total = x.shape
    assert N == graph_size
    c_in = d_in_total - graph_size
    c_out = w.shape[1]
    assert w.shape[0] == c_in

    # Split packed input into two lane-aligned pallas inputs.
    a = x[:, :, :N]        # (B, N, N)
    feat = x[:, :, N:]     # (B, N, C_in)

    if block_batch is None:
        block_batch = _pick_block_batch(B)
    assert B % block_batch == 0
    grid_b = B // block_batch

    # VMEM budget: double-buffered input/output blocks + headroom (portable to
    # v7x's smaller 64 MiB physical VMEM).
    block_bytes = 4 * (block_batch * N * (N + c_in + c_out) + c_in * c_out)
    vmem_limit = int(min(32 * 1024 * 1024,
                         max(4 * block_bytes + (1 << 20), 16 * 1024 * 1024)))

    cost = pl.CostEstimate(
        flops=2 * B * N * c_in * c_out + 2 * B * N * N * c_out,
        transcendentals=B * N,  # rsqrt per node
        bytes_accessed=4 * (B * N * (N + c_in + c_out) + c_in * c_out),
    )

    out_feat = pl.pallas_call(
        _gcn_kernel,
        out_shape=jax.ShapeDtypeStruct((B, N, c_out), x.dtype),
        grid_spec=pltpu.PrefetchScalarGridSpec(
            num_scalar_prefetch=0,
            grid=(grid_b,),
            in_specs=[
                pl.BlockSpec((block_batch, N, N), lambda b: (b, 0, 0)),
                pl.BlockSpec((block_batch, N, c_in), lambda b: (b, 0, 0)),
                pl.BlockSpec((c_in, c_out), lambda b: (0, 0)),
            ],
            out_specs=pl.BlockSpec((block_batch, N, c_out), lambda b: (b, 0, 0)),
        ),
        compiler_params=pltpu.CompilerParams(
            dimension_semantics=("parallel",),
            vmem_limit_bytes=vmem_limit,
        ),
        cost_estimate=cost,
    )(a, feat, w)

    # Adjacency passthrough done in XLA (no redundant HBM writes in the kernel).
    return jnp.concatenate([a, out_feat], axis=2)


def _reference(x, w, graph_size):
    # pure-JAX reference mirroring the PyTorch forward (in f32)
    a = x[:, :, :graph_size]
    feat = x[:, :, graph_size:]
    deg = jnp.sum(a, axis=2)
    d_inv_sqrt = jnp.where(deg != 0, 1.0 / jnp.sqrt(deg), 0.0)
    eye = jnp.eye(graph_size, dtype=x.dtype)[None]
    a_hat = a + eye
    a_norm = d_inv_sqrt[:, :, None] * a_hat * d_inv_sqrt[:, None, :]
    out = jax.nn.relu(jnp.einsum("bij,bjc,cd->bid", a_norm, feat, w))
    return jnp.concatenate([a, out], axis=2)


if __name__ == "__main__":
    batch = 8
    graph_size = 16
    in_channels = 8
    out_channels = 8

    key = jax.random.PRNGKey(0)
    k_a, k_f, k_w = jax.random.split(key, 3)

    # adjacency-like (0/1) block + feature block, packed like the module expects
    adj = (jax.random.uniform(k_a, (batch, graph_size, graph_size)) > 0.5
           ).astype(jnp.float32)
    feat = jax.random.normal(k_f, (batch, graph_size, in_channels), dtype=jnp.float32)
    x = jnp.concatenate([adj, feat], axis=2)              # (8, 16, 24)

    # W ~ torch.rand(in_channels, out_channels): uniform [0, 1)
    w = jax.random.uniform(k_w, (in_channels, out_channels), dtype=jnp.float32)

    y = gcn_conv(x, w, graph_size)
    jax.block_until_ready(y)

    y_ref = _reference(x, w, graph_size)
    assert y.shape == (batch, graph_size, graph_size + out_channels)
    assert jnp.allclose(y, y_ref, atol=1e-4, rtol=1e-4)

    print("KERNEL_OK")
</pallas_src>

<mosaic_0001>
module attributes {stable_mosaic.version = 11 : i64} {
  func.func @_gcn_kernel(%arg0: i32, %arg1: memref<4x16x16xf32, #tpu.memory_space<vmem>>, %arg2: memref<4x16x8xf32, #tpu.memory_space<vmem>>, %arg3: memref<8x8xf32, #tpu.memory_space<vmem>>, %arg4: memref<4x16x8xf32, #tpu.memory_space<vmem>>) attributes {dimension_semantics = [#tpu.dimension_semantics<parallel>], iteration_bounds = array<i64: 2>, scalar_prefetch = 0 : i64, scratch_operands = 0 : i64, tpu.core_type = #tpu.core_type<tc>, window_params = [{transform_indices = @transform_0, window_bounds = array<i64: 4, 16, 16>}, {transform_indices = @transform_1, window_bounds = array<i64: 4, 16, 8>}, {pipeline_mode = #tpu.pipeline_mode<synchronous>, transform_indices = @transform_2, window_bounds = array<i64: 8, 8>}, {transform_indices = @transform_3, window_bounds = array<i64: 4, 16, 8>}]} {
    %c0 = arith.constant 0 : index
    %c0_0 = arith.constant 0 : index
    %c0_1 = arith.constant 0 : index
    %0 = vector.load %arg1[%c0, %c0_0, %c0_1] : memref<4x16x16xf32, #tpu.memory_space<vmem>>, vector<4x16x16xf32>
    %c0_2 = arith.constant 0 : index
    %c0_3 = arith.constant 0 : index
    %c0_4 = arith.constant 0 : index
    %1 = vector.load %arg2[%c0_2, %c0_3, %c0_4] : memref<4x16x8xf32, #tpu.memory_space<vmem>>, vector<4x16x8xf32>
    %c0_5 = arith.constant 0 : index
    %c0_6 = arith.constant 0 : index
    %2 = vector.load %arg3[%c0_5, %c0_6] : memref<8x8xf32, #tpu.memory_space<vmem>>, vector<8x8xf32>
    %cst = arith.constant dense<0.000000e+00> : vector<4x16xf32>
    %3 = vector.multi_reduction <add>, %0, %cst [2] : vector<4x16x16xf32> to vector<4x16xf32>
    %4 = vector.shape_cast %3 : vector<4x16xf32> to vector<4x16x1xf32>
    %cst_7 = arith.constant 0.000000e+00 : f32
    %5 = vector.broadcast %cst_7 : f32 to vector<4x16x1xf32>
    %6 = arith.cmpf one, %4, %5 : vector<4x16x1xf32>
    %7 = math.rsqrt %4 : vector<4x16x1xf32>
    %cst_8 = arith.constant 0.000000e+00 : f32
    %8 = vector.broadcast %cst_8 : f32 to vector<4x16x1xf32>
    %9 = arith.select %6, %7, %8 : vector<4x16x1xi1>, vector<4x16x1xf32>
    %10 = vector.broadcast %9 : vector<4x16x1xf32> to vector<4x16x8xf32>
    %11 = arith.mulf %10, %1 : vector<4x16x8xf32>
    %12 = vector.shape_cast %11 : vector<4x16x8xf32> to vector<64x8xf32>
    %cst_9 = arith.constant dense<0.000000e+00> : vector<64x8xf32>
    %13 = tpu.matmul %12, %2, %cst_9 {dimension_numbers = #tpu.dot_dimension_numbers<[1], [0], [0], [1], [0, 0, 1, 1], [], []>} : vector<64x8xf32>, vector<8x8xf32>, vector<64x8xf32> -> vector<64x8xf32>
    %14 = vector.shape_cast %13 : vector<64x8xf32> to vector<4x16x8xf32>
    "tpu.trace_start"() <{level = 10 : i32, message = "bij,bjc->bic"}> : () -> ()
    %cst_10 = arith.constant dense<0.000000e+00> : vector<4x16x8xf32>
    %15 = tpu.matmul %0, %14, %cst_10 {dimension_numbers = #tpu.dot_dimension_numbers<[2], [1], [1], [2], [0, 0, 0, 1, 1, 2], [0], [0]>} : vector<4x16x16xf32>, vector<4x16x8xf32>, vector<4x16x8xf32> -> vector<4x16x8xf32>
    "tpu.trace_stop"() : () -> ()
    %16 = arith.addf %15, %14 : vector<4x16x8xf32>
    %17 = vector.broadcast %9 : vector<4x16x1xf32> to vector<4x16x8xf32>
    %18 = arith.mulf %17, %16 : vector<4x16x8xf32>
    %cst_11 = arith.constant 0.000000e+00 : f32
    %19 = vector.broadcast %cst_11 : f32 to vector<4x16x8xf32>
    %20 = arith.maximumf %18, %19 : vector<4x16x8xf32>
    %c0_12 = arith.constant 0 : index
    %c0_13 = arith.constant 0 : index
    %c0_14 = arith.constant 0 : index
    %21 = vector.load %arg4[%c0_12, %c0_13, %c0_14] : memref<4x16x8xf32, #tpu.memory_space<vmem>>, vector<4x16x8xf32>
    tpu.vector_store %arg4[%c0_12, %c0_13, %c0_14], %20 {strides = array<i32>} : memref<4x16x8xf32, #tpu.memory_space<vmem>>, vector<4x16x8xf32>,
    return
  }
  func.func @transform_0(%arg0: i32) -> (i32, i32, i32) {
    %c0_i32 = arith.constant 0 : i32
    %c0_i32_0 = arith.constant 0 : i32
    %c0_i32_1 = arith.constant 0 : i32
    return %arg0, %c0_i32, %c0_i32_0 : i32, i32, i32
  }
  func.func @transform_1(%arg0: i32) -> (i32, i32, i32) {
    %c0_i32 = arith.constant 0 : i32
    %c0_i32_0 = arith.constant 0 : i32
    %c0_i32_1 = arith.constant 0 : i32
    return %arg0, %c0_i32, %c0_i32_0 : i32, i32, i32
  }
  func.func @transform_2(%arg0: i32) -> (i32, i32) {
    %c0_i32 = arith.constant 0 : i32
    %c0_i32_0 = arith.constant 0 : i32
    %c0_i32_1 = arith.constant 0 : i32
    return %c0_i32, %c0_i32_0 : i32, i32
  }
  func.func @transform_3(%arg0: i32) -> (i32, i32, i32) {
    %c0_i32 = arith.constant 0 : i32
    %c0_i32_0 = arith.constant 0 : i32
    %c0_i32_1 = arith.constant 0 : i32
    return %arg0, %c0_i32, %c0_i32_0 : i32, i32, i32
  }
}

</mosaic_0001>

<llo_original>
// kernel: tpu_custom_call.1
$region0: #{tpu_custom_call.1}
  #allocation0 [shape = 'u32[]', space=smem, size = 0x4, offset = 0x4, fixed_abs, tag = 'smem constant byte address 0x4 - core index']
  #allocation1 [shape = 'u32[72,128]{1,0:T(1,128)}', space=vmem, size = 0x9000, scoped, tag = 'internal scratch']
  %s0 = inlined_call_operand.vmem [shape: f32[8,16,16], index: 0, kind: input, shape index: {}]
  %s1 = inlined_call_operand.vmem [shape: f32[8,16,8], index: 1, kind: input, shape index: {}]
  %s2 = inlined_call_operand.vmem [shape: f32[8,8], index: 2, kind: input, shape index: {}]
  %s3 = inlined_call_operand.vmem [shape: f32[8,16,8], index: 3, kind: output, shape index: {}]
  %s4 = sld [smem:[#allocation0]]
  $region45: #{tpu_custom_call.1} parent=0
    _
  %s6 = ssub.s32 1, %s4
  %s7 = scalar_select 0, %s6, %s4
  loop: start=0, step=1, limit=4
  $region2: #{tpu_custom_call.1} parent=0 // loop_pre_header
    _
  $region3: #{tpu_custom_call.1} parent=0 // loop_header
    %s9 = sphi 0, %s13
    %p10 = scmp.ge.s32.totalorder %s9, 4
    %s19 = sphi 0, %s21
    %s22 = sphi 0, %s19
    %s23 = sphi 0, %s22
    %s39 = sphi 0, %s23
    %s45 = sphi 0, %s47
    %s48 = sphi 0, %s45
    %s49 = sphi 0, %s48
    %s65 = sphi 0, %s49
    %s69 = sphi 0, %s69
    %s71 = sphi 0, %s69
    %s72 = sphi 0, %s71
    %s86 = sphi 0, %s72
    %s92 = sphi 0, %s94
    %s95 = sphi 0, %s92
    %s96 = sphi 0, %s95
    %s112 = sphi 0, %s96
  $region4: #{tpu_custom_call.1} parent=0 // loop_header_branch
    %12 = sbr.rel (%p10) target = $region8
  $region5: #{tpu_custom_call.1} parent=0 // loop_body
    %s14 = ssub.s32 %s9, 1
    %s15 = ssub.s32 %s9, 2
    %s16 = sadd.s32 %s9, 1
    %s17 = ssub.s32 %s9, %s16
    %p18 = scmp.eq.s32.totalorder %s17, 0
    %s20 = sadd.s32 %s19, 1
    %s21 = scalar_select %p18, %s19, %s20
    %p24 = pneg %p18
    %p25 = scmp.eq.s32.totalorder %s9, 1
    %p26 = por %p24, %p25
    %p27 = scmp.ne.s32.totalorder %s19, %s22
    %p28 = scmp.eq.s32.totalorder %s9, 0
    %p29 = por %p27, %p28
    %p30 = scmp.ne.s32.totalorder %s19, %s22
    %p31 = scmp.eq.s32.totalorder %s14, 1
    %p32 = por %p30, %p31
    %p33 = scmp.ne.s32.totalorder %s22, %s23
    %p34 = scmp.eq.s32.totalorder %s14, 0
    %p35 = por %p33, %p34
    %p36 = scmp.ne.s32.totalorder %s22, %s23
    %p37 = scmp.eq.s32.totalorder %s15, 1
    %p38 = por %p36, %p37
    %p40 = scmp.ne.s32.totalorder %s23, %s39
    %p41 = scmp.eq.s32.totalorder %s15, 0
    %p42 = por %p40, %p41
    %s43 = ssub.s32 %s9, %s16
    %p44 = scmp.eq.s32.totalorder %s43, 0
    %s46 = sadd.s32 %s45, 1
    %s47 = scalar_select %p44, %s45, %s46
    %p50 = pneg %p44
    %p51 = scmp.eq.s32.totalorder %s9, 1
    %p52 = por %p50, %p51
    %p53 = scmp.ne.s32.totalorder %s45, %s48
    %p54 = scmp.eq.s32.totalorder %s9, 0
    %p55 = por %p53, %p54
    %p56 = scmp.ne.s32.totalorder %s45, %s48
    %p57 = scmp.eq.s32.totalorder %s14, 1
    %p58 = por %p56, %p57
    %p59 = scmp.ne.s32.totalorder %s48, %s49
    %p60 = scmp.eq.s32.totalorder %s14, 0
    %p61 = por %p59, %p60
    %p62 = scmp.ne.s32.totalorder %s48, %s49
    %p63 = scmp.eq.s32.totalorder %s15, 1
    %p64 = por %p62, %p63
    %p66 = scmp.ne.s32.totalorder %s49, %s65
    %p67 = scmp.eq.s32.totalorder %s15, 0
    %p68 = por %p66, %p67
    %s70 = sadd.s32 %s69, 1
    %p73 = scmp.eq.s32.totalorder %s9, 1
    %p74 = scmp.ne.s32.totalorder %s69, %s71
    %p75 = scmp.eq.s32.totalorder %s9, 0
    %p76 = por %p74, %p75
    %p77 = scmp.ne.s32.totalorder %s69, %s71
    %p78 = scmp.eq.s32.totalorder %s14, 1
    %p79 = por %p77, %p78
    %p80 = scmp.ne.s32.totalorder %s71, %s72
    %p81 = scmp.eq.s32.totalorder %s14, 0
    %p82 = por %p80, %p81
    %p83 = scmp.ne.s32.totalorder %s71, %s72
    %p84 = scmp.eq.s32.totalorder %s15, 1
    %p85 = por %p83, %p84
    %p87 = scmp.ne.s32.totalorder %s72, %s86
    %p88 = scmp.eq.s32.totalorder %s15, 0
    %p89 = por %p87, %p88
    %s90 = ssub.s32 %s9, %s16
    %p91 = scmp.eq.s32.totalorder %s90, 0
    %s93 = sadd.s32 %s92, 1
    %s94 = scalar_select %p91, %s92, %s93
    %p97 = pneg %p91
    %p98 = scmp.eq.s32.totalorder %s9, 1
    %p99 = por %p97, %p98
    %p100 = scmp.ne.s32.totalorder %s92, %s95
    %p101 = scmp.eq.s32.totalorder %s9, 0
    %p102 = por %p100, %p101
    %p103 = scmp.ne.s32.totalorder %s92, %s95
    %p104 = scmp.eq.s32.totalorder %s14, 1
    %p105 = por %p103, %p104
    %p106 = scmp.ne.s32.totalorder %s95, %s96
    %p107 = scmp.eq.s32.totalorder %s14, 0
    %p108 = por %p106, %p107
    %p109 = scmp.ne.s32.totalorder %s95, %s96
    %p110 = scmp.eq.s32.totalorder %s15, 1
    %p111 = por %p109, %p110
    %p113 = scmp.ne.s32.totalorder %s96, %s112
    %p114 = scmp.eq.s32.totalorder %s15, 0
    %p115 = por %p113, %p114
    %p116 = scmp.le.s32.totalorder 1, %s9
    %p117 = scmp.lt.s32.totalorder %s9, 3
    %p118 = pnand %p116, %p117
    %p119 = pneg %p118
    // Predicated region
    $region9: #{tpu_custom_call.1} parent=5 // pred_check
      _
    $region10: #{tpu_custom_call.1} parent=5 // pred_check_branch
      %121 = sbr.rel (%p118) target = $region12
    $region11: #{tpu_custom_call.1} parent=5 // pred_region
      %s122 = ssub.s32 %s9, 1
      // Predicated region
      $region13: #{tpu_custom_call.1} parent=11 // pred_check
        %p123 = pneg %p82
      $region14: #{tpu_custom_call.1} parent=11 // pred_check_branch
        %125 = sbr.rel (%p123) target = $region16
      $region15: #{tpu_custom_call.1} parent=11 // pred_region
        _
      $region16: #{tpu_custom_call.1} parent=11 // pred_fallthru
        _
    $region12: #{tpu_custom_call.1} parent=5 // pred_fallthru
      _
    %p126 = scmp.lt.s32.totalorder %s9, 2
    // Predicated region
    $region17: #{tpu_custom_call.1} parent=5 // pred_check
      %p127 = pneg %p126
    $region18: #{tpu_custom_call.1} parent=5 // pred_check_branch
      %129 = sbr.rel (%p127) target = $region20
    $region19: #{tpu_custom_call.1} parent=5 // pred_region
      // Predicated region
      $region21: #{tpu_custom_call.1} parent=19 // pred_check
        %p130 = pneg %p29
      $region22: #{tpu_custom_call.1} parent=19 // pred_check_branch
        %132 = sbr.rel (%p130) target = $region24
      $region23: #{tpu_custom_call.1} parent=19 // pred_region
        %s133 = smul.u32 4, %s9
        %p134 = scmp.lt.s32.totalorder %s133, 7
        %s135 = scalar_select %p134, %s133, 7
        %s136 = smul.addr %s135, 2
        %s137 = smul.addr %s136, 8
        %s138 = scalar_lea.vmem %s0, %s137
        %s139 = smul.u32 4, %s9
      $region24: #{tpu_custom_call.1} parent=19 // pred_fallthru
        _
      // Predicated region
      $region25: #{tpu_custom_call.1} parent=19 // pred_check
        %p140 = pneg %p55
      $region26: #{tpu_custom_call.1} parent=19 // pred_check_branch
        %142 = sbr.rel (%p140) target = $region28
      $region27: #{tpu_custom_call.1} parent=19 // pred_region
        %s143 = smul.u32 4, %s9
        %p144 = scmp.lt.s32.totalorder %s143, 7
        %s145 = scalar_select %p144, %s143, 7
        %s146 = smul.addr %s145, 2
        %s147 = smul.addr %s146, 8
        %s148 = scalar_lea.vmem %s1, %s147
        %s149 = smul.u32 4, %s9
      $region28: #{tpu_custom_call.1} parent=19 // pred_fallthru
        _
    $region20: #{tpu_custom_call.1} parent=5 // pred_fallthru
      _
    %p150 = scmp.le.s32.totalorder 1, %s9
    %p151 = scmp.lt.s32.totalorder %s9, 3
    %p152 = pnand %p150, %p151
    %p153 = pneg %p152
    // Predicated region
    $region29: #{tpu_custom_call.1} parent=5 // pred_check
      _
    $region30: #{tpu_custom_call.1} parent=5 // pred_check_branch
      %155 = sbr.rel (%p152) target = $region32
    $region31: #{tpu_custom_call.1} parent=5 // pred_region
      %s156 = ssub.s32 %s9, 1
      %s157 = smul.u32 4, %s14
      %p158 = scmp.lt.s32.totalorder %s157, 7
      %s159 = scalar_select %p158, %s157, 7
      %s160 = smul.addr %s159, 2
      %s161 = smul.addr %s160, 8
      %s162 = scalar_lea.vmem %s0, %s161
      %p163 = pneg %p35
      %p164 = pneg %p32
      %s165 = smul.u32 4, %s14
      %p166 = scmp.lt.s32.totalorder %s165, 7
      %s167 = scalar_select %p166, %s165, 7
      %s168 = smul.addr %s167, 2
      %s169 = smul.addr %s168, 8
      %s170 = scalar_lea.vmem %s1, %s169
      %p171 = pneg %p61
      %p172 = pneg %p58
      %p173 = pneg %p82
      %p174 = pneg %p79
      %p175 = pneg %p108
      %p176 = pneg %p105
      %s177 = smul.u32 4, %s14
      %p178 = scmp.lt.s32.totalorder %s177, 7
      %s179 = scalar_select %p178, %s177, 7
      %s180 = smul.addr %s179, 2
      %s181 = smul.addr %s180, 8
      %s182 = scalar_lea.vmem %s3, %s181
      %s183 = smul.u32 4, %s14
      %p184 = scmp.lt.s32.totalorder %s183, 7
      %s185 = scalar_select %p184, %s183, 7
      %s186 = smul.addr %s185, 2
      %s187 = smul.addr %s186, 8
      %s188 = scalar_lea.vmem %s0, %s187
      %s189 = smul.u32 4, %s14
      %s190 = smul.u32 4, %s14
      %p191 = scmp.lt.s32.totalorder %s190, 7
      %s192 = scalar_select %p191, %s190, 7
      %s193 = smul.addr %s192, 2
      %s194 = smul.addr %s193, 8
      %s195 = scalar_lea.vmem %s1, %s194
      %s196 = smul.u32 4, %s14
      %s197 = smul.u32 4, %s14
      %p198 = scmp.lt.s32.totalorder %s197, 7
      %s199 = scalar_select %p198, %s197, 7
      %s200 = smul.addr %s199, 2
      %s201 = smul.addr %s200, 8
      %s202 = scalar_lea.vmem %s3, %s201
      %s203 = smul.u32 4, %s14
      %v204 = vld [vmem:[%s188] sm:$0xff]
      %v205 = vld [vmem:[%s188 + $0x8] sm:$0xff]
      %v206 = vld [vmem:[%s188 + $0x10] sm:$0xff]
      %v207 = vld [vmem:[%s188 + $0x18] sm:$0xff]
      %v208 = vld [vmem:[%s188 + $0x20] sm:$0xff]
      %v209 = vld [vmem:[%s188 + $0x28] sm:$0xff]
      %v210 = vld [vmem:[%s188 + $0x30] sm:$0xff]
      %v211 = vld [vmem:[%s188 + $0x38] sm:$0xff]
      %v212 = vld [vmem:[%s195] sm:$0xff]
      %v213 = vld [vmem:[%s195 + $0x8] sm:$0xff]
      %v214 = vld [vmem:[%s195 + $0x10] sm:$0xff]
      %v215 = vld [vmem:[%s195 + $0x18] sm:$0xff]
      %v216 = vld [vmem:[%s195 + $0x20] sm:$0xff]
      %v217 = vld [vmem:[%s195 + $0x28] sm:$0xff]
      %v218 = vld [vmem:[%s195 + $0x30] sm:$0xff]
      %v219 = vld [vmem:[%s195 + $0x38] sm:$0xff]
      %v220 = vld [vmem:[%s2] sm:$0xff]
      %vm221 = vcmask 130048
      %v222 = vsel %vm221, %v204, 0.0
      %223 = vadd.xlane.f32.xlu0 %v222
      %v224 = vpop.xlane.xlu0 %223
      %v225 = vsel %vm221, %v205, 0.0
      %226 = vadd.xlane.f32.xlu0 %v225
      %v227 = vpop.xlane.xlu0 %226
      %v228 = vsel %vm221, %v206, 0.0
      %229 = vadd.xlane.f32.xlu0 %v228
      %v230 = vpop.xlane.xlu0 %229
      %v231 = vsel %vm221, %v207, 0.0
      %232 = vadd.xlane.f32.xlu0 %v231
      %v233 = vpop.xlane.xlu0 %232
      %v234 = vsel %vm221, %v208, 0.0
      %235 = vadd.xlane.f32.xlu0 %v234
      %v236 = vpop.xlane.xlu0 %235
      %v237 = vsel %vm221, %v209, 0.0
      %238 = vadd.xlane.f32.xlu0 %v237
      %v239 = vpop.xlane.xlu0 %238
      %v240 = vsel %vm221, %v210, 0.0
      %241 = vadd.xlane.f32.xlu0 %v240
      %v242 = vpop.xlane.xlu0 %241
      %v243 = vsel %vm221, %v211, 0.0
      %244 = vadd.xlane.f32.xlu0 %v243
      %v245 = vpop.xlane.xlu0 %244
      %vm246 = vcmp.ne.f32.partialorder %v224, 0.0
      %vm247 = vcmp.ne.f32.partialorder %v227, 0.0
      %vm248 = vcmp.ne.f32.partialorder %v230, 0.0
      %vm249 = vcmp.ne.f32.partialorder %v233, 0.0
      %vm250 = vcmp.ne.f32.partialorder %v236, 0.0
      %vm251 = vcmp.ne.f32.partialorder %v239, 0.0
      %vm252 = vcmp.ne.f32.partialorder %v242, 0.0
      %vm253 = vcmp.ne.f32.partialorder %v245, 0.0
      %v254 = vrsqrt.pop %v224
      %v255 = vmul.f32 %v254, %v224
      %v256 = vmul.f32 %v255, %v254
      %v257 = vmul.f32 0.5, %v256
      %v258 = vsub.f32 1.5, %v257
      %v259 = vmul.f32 %v254, %v258
      %vm260 = vweird.f32 %v224
      %vm261 = vweird.f32 %v254
      %vm262 = vmor %vm260, %vm261
      %v263 = vsel %vm262, %v254, %v259
      %v264 = vrsqrt.pop %v227
      %v265 = vmul.f32 %v264, %v227
      %v266 = vmul.f32 %v265, %v264
      %v267 = vmul.f32 0.5, %v266
      %v268 = vsub.f32 1.5, %v267
      %v269 = vmul.f32 %v264, %v268
      %vm270 = vweird.f32 %v227
      %vm271 = vweird.f32 %v264
      %vm272 = vmor %vm270, %vm271
      %v273 = vsel %vm272, %v264, %v269
      %v274 = vrsqrt.pop %v230
      %v275 = vmul.f32 %v274, %v230
      %v276 = vmul.f32 %v275, %v274
      %v277 = vmul.f32 0.5, %v276
      %v278 = vsub.f32 1.5, %v277
      %v279 = vmul.f32 %v274, %v278
      %vm280 = vweird.f32 %v230
      %vm281 = vweird.f32 %v274
      %vm282 = vmor %vm280, %vm281
      %v283 = vsel %vm282, %v274, %v279
      %v284 = vrsqrt.pop %v233
      %v285 = vmul.f32 %v284, %v233
      %v286 = vmul.f32 %v285, %v284
      %v287 = vmul.f32 0.5, %v286
      %v288 = vsub.f32 1.5, %v287
      %v289 = vmul.f32 %v284, %v288
      %vm290 = vweird.f32 %v233
      %vm291 = vweird.f32 %v284
      %vm292 = vmor %vm290, %vm291
      %v293 = vsel %vm292, %v284, %v289
      %v294 = vrsqrt.pop %v236
      %v295 = vmul.f32 %v294, %v236
      %v296 = vmul.f32 %v295, %v294
      %v297 = vmul.f32 0.5, %v296
      %v298 = vsub.f32 1.5, %v297
      %v299 = vmul.f32 %v294, %v298
      %vm300 = vweird.f32 %v236
      %vm301 = vweird.f32 %v294
      %vm302 = vmor %vm300, %vm301
      %v303 = vsel %vm302, %v294, %v299
      %v304 = vrsqrt.pop %v239
      %v305 = vmul.f32 %v304, %v239
      %v306 = vmul.f32 %v305, %v304
      %v307 = vmul.f32 0.5, %v306
      %v308 = vsub.f32 1.5, %v307
      %v309 = vmul.f32 %v304, %v308
      %vm310 = vweird.f32 %v239
      %vm311 = vweird.f32 %v304
      %vm312 = vmor %vm310, %vm311
      %v313 = vsel %vm312, %v304, %v309
      %v314 = vrsqrt.pop %v242
      %v315 = vmul.f32 %v314, %v242
      %v316 = vmul.f32 %v315, %v314
      %v317 = vmul.f32 0.5, %v316
      %v318 = vsub.f32 1.5, %v317
      %v319 = vmul.f32 %v314, %v318
      %vm320 = vweird.f32 %v242
      %vm321 = vweird.f32 %v314
      %vm322 = vmor %vm320, %vm321
      %v323 = vsel %vm322, %v314, %v319
      %v324 = vrsqrt.pop %v245
      %v325 = vmul.f32 %v324, %v245
      %v326 = vmul.f32 %v325, %v324
      %v327 = vmul.f32 0.5, %v326
      %v328 = vsub.f32 1.5, %v327
      %v329 = vmul.f32 %v324, %v328
      %vm330 = vweird.f32 %v245
      %vm331 = vweird.f32 %v324
      %vm332 = vmor %vm330, %vm331
      %v333 = vsel %vm332, %v324, %v329
      %v334 = vsel %vm246, %v263, 0.0
      %v335 = vsel %vm247, %v273, 0.0
      %v336 = vsel %vm248, %v283, 0.0
      %v337 = vsel %vm249, %v293, 0.0
      %v338 = vsel %vm250, %v303, 0.0
      %v339 = vsel %vm251, %v313, 0.0
      %v340 = vsel %vm252, %v323, 0.0
      %v341 = vsel %vm253, %v333, 0.0
      %v342 = vmul.f32 %v334, %v212
      %v343 = vmul.f32 %v335, %v213
      %v344 = vmul.f32 %v336, %v214
      %v345 = vmul.f32 %v337, %v215
      %v346 = vmul.f32 %v338, %v216
      %v347 = vmul.f32 %v339, %v217
      %v348 = vmul.f32 %v340, %v218
      %v349 = vmul.f32 %v341, %v219
      %vm350 = vcmask 64512
      %v352 = vsel %vm350, %v342, 0
      %v355 = vsel %vm350, %v343, 0
      %v358 = vsel %vm350, %v344, 0
      %v361 = vsel %vm350, %v345, 0
      %v364 = vsel %vm350, %v346, 0
      %v367 = vsel %vm350, %v347, 0
      %v370 = vsel %vm350, %v348, 0
      %v373 = vsel %vm350, %v349, 0
      %375 = vmatpush.msra.mxu0 0.0
      %376 = vmatpush.msra.mxu0 0.0
      %377 = vmatpush.msra.mxu0 0.0
      %378 = vmatpush.msra.mxu0 0.0
      %379 = vmatpush.msra.mxu0 0.0
      %380 = vmatpush.msra.mxu0 0.0
      %381 = vmatpush.msra.mxu0 0.0
      %382 = vmatpush.msra.mxu0 0.0
      %383 = vmatpush.msra.mxu0 0.0
      %384 = vmatpush.msra.mxu0 0.0
      %385 = vmatpush.msra.mxu0 0.0
      %386 = vmatpush.msra.mxu0 0.0
      %387 = vmatpush.msra.mxu0 0.0
      %388 = vmatpush.msra.mxu0 0.0
      %389 = vmatpush.msra.mxu0 0.0
      %390 = vmatpush.msra.mxu0 %v220
      %391 = vmatmul.f32.gmra.mxu0 %v352
      %v392 = vpop.f32.mrf.mxu0
      %v393 = vadd.f32 0.0, %v392
      %394 = vmatmul.f32.gmra.mxu0 %v355
      %v395 = vpop.f32.mrf.mxu0
      %v396 = vadd.f32 0.0, %v395
      %397 = vmatmul.f32.gmra.mxu0 %v358
      %v398 = vpop.f32.mrf.mxu0
      %v399 = vadd.f32 0.0, %v398
      %400 = vmatmul.f32.gmra.mxu0 %v361
      %v401 = vpop.f32.mrf.mxu0
      %v402 = vadd.f32 0.0, %v401
      %403 = vmatmul.f32.gmra.mxu0 %v364
      %v404 = vpop.f32.mrf.mxu0
      %v405 = vadd.f32 0.0, %v404
      %406 = vmatmul.f32.gmra.mxu0 %v367
      %v407 = vpop.f32.mrf.mxu0
      %v408 = vadd.f32 0.0, %v407
      %409 = vmatmul.f32.gmra.mxu0 %v370
      %v410 = vpop.f32.mrf.mxu0
      %v411 = vadd.f32 0.0, %v410
      %412 = vmatmul.f32.gmra.mxu0 %v373
      %v413 = vpop.f32.mrf.mxu0
      %v414 = vadd.f32 0.0, %v413
      %415 = vdwg.mxu0
      %v417 = vsel %vm221, %v204, 0
      %v420 = vsel %vm221, %v205, 0
      %422 = vmatpush.msra.mxu0 0.0
      %423 = vmatpush.msra.mxu0 0.0
      %424 = vmatpush.msra.mxu0 0.0
      %425 = vmatpush.msra.mxu0 0.0
      %426 = vmatpush.msra.mxu0 0.0
      %427 = vmatpush.msra.mxu0 0.0
      %428 = vmatpush.msra.mxu0 0.0
      %429 = vmatpush.msra.mxu0 0.0
      %430 = vmatpush.msra.mxu0 0.0
      %431 = vmatpush.msra.mxu0 0.0
      %432 = vmatpush.msra.mxu0 0.0
      %433 = vmatpush.msra.mxu0 0.0
      %434 = vmatpush.msra.mxu0 0.0
      %435 = vmatpush.msra.mxu0 0.0
      %436 = vmatpush.msra.mxu0 %v396
      %437 = vmatpush.msra.mxu0 %v393
      %438 = vmatmul.f32.gmra.mxu0 %v417
      %v439 = vpop.f32.mrf.mxu0
      %v440 = vadd.f32 %v393, %v439
      %441 = vmatmul.f32.gmra.mxu0 %v420
      %v442 = vpop.f32.mrf.mxu0
      %v443 = vadd.f32 %v396, %v442
      %444 = vdwg.mxu0
      %v446 = vsel %vm221, %v206, 0
      %v449 = vsel %vm221, %v207, 0
      %451 = vmatpush.msra.mxu0 0.0
      %452 = vmatpush.msra.mxu0 0.0
      %453 = vmatpush.msra.mxu0 0.0
      %454 = vmatpush.msra.mxu0 0.0
      %455 = vmatpush.msra.mxu0 0.0
      %456 = vmatpush.msra.mxu0 0.0
      %457 = vmatpush.msra.mxu0 0.0
      %458 = vmatpush.msra.mxu0 0.0
      %459 = vmatpush.msra.mxu0 0.0
      %460 = vmatpush.msra.mxu0 0.0
      %461 = vmatpush.msra.mxu0 0.0
      %462 = vmatpush.msra.mxu0 0.0
      %463 = vmatpush.msra.mxu0 0.0
      %464 = vmatpush.msra.mxu0 0.0
      %465 = vmatpush.msra.mxu0 %v402
      %466 = vmatpush.msra.mxu0 %v399
      %467 = vmatmul.f32.gmra.mxu0 %v446
      %v468 = vpop.f32.mrf.mxu0
      %v469 = vadd.f32 %v399, %v468
      %470 = vmatmul.f32.gmra.mxu0 %v449
      %v471 = vpop.f32.mrf.mxu0
      %v472 = vadd.f32 %v402, %v471
      %473 = vdwg.mxu0
      %v475 = vsel %vm221, %v208, 0
      %v478 = vsel %vm221, %v209, 0
      %480 = vmatpush.msra.mxu0 0.0
      %481 = vmatpush.msra.mxu0 0.0
      %482 = vmatpush.msra.mxu0 0.0
      %483 = vmatpush.msra.mxu0 0.0
      %484 = vmatpush.msra.mxu0 0.0
      %485 = vmatpush.msra.mxu0 0.0
      %486 = vmatpush.msra.mxu0 0.0
      %487 = vmatpush.msra.mxu0 0.0
      %488 = vmatpush.msra.mxu0 0.0
      %489 = vmatpush.msra.mxu0 0.0
      %490 = vmatpush.msra.mxu0 0.0
      %491 = vmatpush.msra.mxu0 0.0
      %492 = vmatpush.msra.mxu0 0.0
      %493 = vmatpush.msra.mxu0 0.0
      %494 = vmatpush.msra.mxu0 %v408
      %495 = vmatpush.msra.mxu0 %v405
      %496 = vmatmul.f32.gmra.mxu0 %v475
      %v497 = vpop.f32.mrf.mxu0
      %v498 = vadd.f32 %v405, %v497
      %499 = vmatmul.f32.gmra.mxu0 %v478
      %v500 = vpop.f32.mrf.mxu0
      %v501 = vadd.f32 %v408, %v500
      %502 = vdwg.mxu0
      %v504 = vsel %vm221, %v210, 0
      %v507 = vsel %vm221, %v211, 0
      %509 = vmatpush.msra.mxu0 0.0
      %510 = vmatpush.msra.mxu0 0.0
      %511 = vmatpush.msra.mxu0 0.0
      %512 = vmatpush.msra.mxu0 0.0
      %513 = vmatpush.msra.mxu0 0.0
      %514 = vmatpush.msra.mxu0 0.0
      %515 = vmatpush.msra.mxu0 0.0
      %516 = vmatpush.msra.mxu0 0.0
      %517 = vmatpush.msra.mxu0 0.0
      %518 = vmatpush.msra.mxu0 0.0
      %519 = vmatpush.msra.mxu0 0.0
      %520 = vmatpush.msra.mxu0 0.0
      %521 = vmatpush.msra.mxu0 0.0
      %522 = vmatpush.msra.mxu0 0.0
      %523 = vmatpush.msra.mxu0 %v414
      %524 = vmatpush.msra.mxu0 %v411
      %525 = vmatmul.f32.gmra.mxu0 %v504
      %v526 = vpop.f32.mrf.mxu0
      %v527 = vadd.f32 %v411, %v526
      %528 = vmatmul.f32.gmra.mxu0 %v507
      %v529 = vpop.f32.mrf.mxu0
      %v530 = vadd.f32 %v414, %v529
      %531 = vdwg.mxu0
      %v532 = vmul.f32 %v334, %v440
      %v533 = vmul.f32 %v335, %v443
      %v534 = vmul.f32 %v336, %v469
      %v535 = vmul.f32 %v337, %v472
      %v536 = vmul.f32 %v338, %v498
      %v537 = vmul.f32 %v339, %v501
      %v538 = vmul.f32 %v340, %v527
      %v539 = vmul.f32 %v341, %v530
      %v540 = vmax.f32 %v532, 0.0
      %v541 = vmax.f32 %v533, 0.0
      %v542 = vmax.f32 %v534, 0.0
      %v543 = vmax.f32 %v535, 0.0
      %v544 = vmax.f32 %v536, 0.0
      %v545 = vmax.f32 %v537, 0.0
      %v546 = vmax.f32 %v538, 0.0
      %v547 = vmax.f32 %v539, 0.0
      %548 = vst.msk [vmem:[%s202] sm:$0xff] %vm350, %v540
      %549 = vst.msk [vmem:[%s202 + $0x8] sm:$0xff] %vm350, %v541
      %550 = vst.msk [vmem:[%s202 + $0x10] sm:$0xff] %vm350, %v542
      %551 = vst.msk [vmem:[%s202 + $0x18] sm:$0xff] %vm350, %v543
      %552 = vst.msk [vmem:[%s202 + $0x20] sm:$0xff] %vm350, %v544
      %553 = vst.msk [vmem:[%s202 + $0x28] sm:$0xff] %vm350, %v545
      %554 = vst.msk [vmem:[%s202 + $0x30] sm:$0xff] %vm350, %v546
      %555 = vst.msk [vmem:[%s202 + $0x38] sm:$0xff] %vm350, %v547
      %s556 = smul.u32 4, %s14
      %p557 = scmp.lt.s32.totalorder %s556, 7
      %s558 = scalar_select %p557, %s556, 7
      %s559 = smul.addr %s558, 2
      %s560 = smul.addr %s559, 8
      %s561 = scalar_lea.vmem %s3, %s560
      // Predicated region
      $region33: #{tpu_custom_call.1} parent=31 // pred_check
        %p562 = pneg %p105
      $region34: #{tpu_custom_call.1} parent=31 // pred_check_branch
        %564 = sbr.rel (%p562) target = $region36
      $region35: #{tpu_custom_call.1} parent=31 // pred_region
        %s565 = smul.u32 4, %s14
      $region36: #{tpu_custom_call.1} parent=31 // pred_fallthru
        _
    $region32: #{tpu_custom_call.1} parent=5 // pred_fallthru
      _
    %p566 = scmp.le.s32.totalorder 2, %s9
    // Predicated region
    $region37: #{tpu_custom_call.1} parent=5 // pred_check
      %p567 = pneg %p566
    $region38: #{tpu_custom_call.1} parent=5 // pred_check_branch
      %569 = sbr.rel (%p567) target = $region40
    $region39: #{tpu_custom_call.1} parent=5 // pred_region
      %s570 = ssub.s32 %s9, 2
      // Predicated region
      $region41: #{tpu_custom_call.1} parent=39 // pred_check
        %p571 = pneg %p111
      $region42: #{tpu_custom_call.1} parent=39 // pred_check_branch
        %573 = sbr.rel (%p571) target = $region44
      $region43: #{tpu_custom_call.1} parent=39 // pred_region
        %s574 = smul.u32 4, %s15
        %p575 = scmp.lt.s32.totalorder %s574, 7
        %s576 = scalar_select %p575, %s574, 7
        %s577 = smul.addr %s576, 2
        %s578 = smul.addr %s577, 8
        %s579 = scalar_lea.vmem %s3, %s578
      $region44: #{tpu_custom_call.1} parent=39 // pred_fallthru
        _
    $region40: #{tpu_custom_call.1} parent=5 // pred_fallthru
      _
  $region6: #{tpu_custom_call.1} parent=0 // loop_footer
    %s13 = sadd.s32 1, %s9
  $region7: #{tpu_custom_call.1} parent=0 // loop_footer_branch
    %8 = sbr.rel target = $region3
  $region8: #{tpu_custom_call.1} parent=0 // loop_exit
    _

</llo_original>
